<compile_context>
chip_gen: v7x
topology: tpu7x:2x2x1
jax: 0.10.0
libtpu: 0.0.40
codegen_flags: <defaults>
</compile_context>

<pallas_src>
from functools import lru_cache

import jax
import jax.numpy as jnp
from jax.experimental import pallas as pl
from jax.experimental.pallas import tpu as pltpu


_RHS_CONST = (12, 64)  # compile-time constant folded into the kernel


@lru_cache(maxsize=None)
def _build_concat(in_len: int):
    """Build (and cache) a jitted pallas_call that copies `in_len` int32
    scalars from SMEM and appends the folded constant (12, 64)."""
    out_len = in_len + len(_RHS_CONST)

    def _concat_kernel(a_ref, o_ref):
        # a_ref: (in_len,) int32 in SMEM; o_ref: (out_len,) int32 in SMEM.
        # Tiny static trip counts -> plain Python unrolled scalar stores.
        for i in range(in_len):
            o_ref[i] = a_ref[i]
        for j, v in enumerate(_RHS_CONST):
            o_ref[in_len + j] = jnp.int32(v)

    call = pl.pallas_call(
        _concat_kernel,
        out_shape=jax.ShapeDtypeStruct((out_len,), jnp.int32),
        in_specs=[pl.BlockSpec(memory_space=pltpu.SMEM)],
        out_specs=pl.BlockSpec(memory_space=pltpu.SMEM),
    )
    return jax.jit(call)


def _concat_device(lhs: tuple):
    """Run the Pallas validation kernel; returns the device array."""
    a = jnp.asarray(lhs, dtype=jnp.int32)
    return _build_concat(len(lhs))(a)


def tuple_add_pallas(lhs: tuple) -> tuple:
    """Pallas-backed equivalent of operator.add(lhs, (12, 64))."""
    out = jax.device_get(_concat_device(lhs))  # single bulk host pull (syncs)
    return tuple(int(v) for v in out.tolist())


class M:
    """JAX/Pallas port of the PyTorch module M.

    Default path: pure-Python tuple concatenation (the op is shape metadata,
    so no device work is the optimal implementation).  `use_pallas=True`
    routes through the SMEM validation kernel instead.
    """

    def __init__(self, use_pallas: bool = False):
        self.use_pallas = use_pallas

    def __call__(self, x379: tuple) -> tuple:
        # x380 = operator.add(x379, (12, 64))  -> tuple concatenation
        if self.use_pallas:
            return tuple_add_pallas(x379)
        return tuple(x379) + _RHS_CONST


if __name__ == "__main__":
    # The module is invoked with the constant tuple (1, 384) in the original
    # script; there is no tensor input to randomize.  (PRNGKey created per
    # instructions, unused.)
    _ = jax.random.PRNGKey(0)

    x379 = (1, 384)
    expected = (1, 384, 12, 64)

    # Fast (default) path: pure Python.
    m = M()
    x380 = m(x379)
    assert x380 == expected, f"fast path: got {x380}, expected {expected}"

    # Pallas validation path: run the kernel once and block on the result.
    out_dev = jax.block_until_ready(_concat_device(x379))
    x380_kernel = tuple(int(v) for v in jax.device_get(out_dev).tolist())
    assert x380_kernel == expected, (
        f"pallas path: got {x380_kernel}, expected {expected}")

    print("KERNEL_OK")
</pallas_src>

<mosaic_0001>
module attributes {stable_mosaic.version = 11 : i64} {
  func.func @_concat_kernel(%arg0: memref<2xi32, #tpu.memory_space<smem>>, %arg1: memref<4xi32, #tpu.memory_space<smem>>) attributes {dimension_semantics = [], scalar_prefetch = 0 : i64, scratch_operands = 0 : i64, tpu.core_type = #tpu.core_type<tc>} {
    %c0 = arith.constant 0 : index
    %0 = memref.load %arg0[%c0] : memref<2xi32, #tpu.memory_space<smem>>
    %c0_0 = arith.constant 0 : index
    %1 = memref.load %arg1[%c0_0] : memref<4xi32, #tpu.memory_space<smem>>
    memref.store %0, %arg1[%c0_0] : memref<4xi32, #tpu.memory_space<smem>>
    %c1 = arith.constant 1 : index
    %2 = memref.load %arg0[%c1] : memref<2xi32, #tpu.memory_space<smem>>
    %c1_1 = arith.constant 1 : index
    %3 = memref.load %arg1[%c1_1] : memref<4xi32, #tpu.memory_space<smem>>
    memref.store %2, %arg1[%c1_1] : memref<4xi32, #tpu.memory_space<smem>>
    %c12_i32 = arith.constant 12 : i32
    %c2 = arith.constant 2 : index
    %4 = memref.load %arg1[%c2] : memref<4xi32, #tpu.memory_space<smem>>
    memref.store %c12_i32, %arg1[%c2] : memref<4xi32, #tpu.memory_space<smem>>
    %c64_i32 = arith.constant 64 : i32
    %c3 = arith.constant 3 : index
    %5 = memref.load %arg1[%c3] : memref<4xi32, #tpu.memory_space<smem>>
    memref.store %c64_i32, %arg1[%c3] : memref<4xi32, #tpu.memory_space<smem>>
    return
  }
}

</mosaic_0001>

<llo_original>
// kernel: tpu_custom_call.1
$region0: #{tpu_custom_call.1}
  #allocation0 [shape = 'u32[]', space=smem, size = 0x4, offset = 0x4, fixed_abs, tag = 'smem constant byte address 0x4 - core index']
  #allocation1 [shape = 'u32[144,128]{1,0:T(1,128)}', space=vmem, size = 0x12000, scoped, tag = 'internal scratch']
  %s0 = inlined_call_operand.hbm [shape: s32[2], index: 0, kind: input, shape index: {}]
  %s1 = inlined_call_operand.hbm [shape: s32[4], index: 1, kind: output, shape index: {}]
  %s2 = sld [smem:[#allocation0]]
  $region18: #{tpu_custom_call.1} parent=0
    _
  %s4 = ssub.s32 1, %s2
  %s5 = scalar_select 0, %s4, %s2
  $region1: #{tpu_custom_call.1} parent=0
    #allocation2 [shape = 'u8[512]{0}', space=smem, size = 0x200, scoped, tag = 'input window, operand 0, single buffered']
    #allocation3 [shape = 's32[1]{0}', space=sflag, size = 0x4, scoped, tag = 'scoped memory for tpu_custom_call.1']
    #allocation4 [shape = 's32[1]{0}', space=sflag, size = 0x4, scoped, tag = 'scoped memory for tpu_custom_call.1']
    #allocation5 [shape = 'u8[512]{0}', space=smem, size = 0x200, scoped, tag = 'output window, operand 0, single buffered']
    %6 = vsyncpa [#allocation3], 0
    %7 = vsyncpa [#allocation4], 0
    // Predicated region
    $region2: #{tpu_custom_call.1} parent=1 // pred_check
      _
    $region3: #{tpu_custom_call.1} parent=1 // pred_check_branch
      %9 = sbr.rel (0) target = $region5
    $region4: #{tpu_custom_call.1} parent=1 // pred_region
      %s11 = ssub.s32 16, 16
      %12 = vsyncadd [#allocation3], %s11
      %15 = dma.hbm_to_smem %s0, 16, [#allocation2], [#allocation3]
    $region5: #{tpu_custom_call.1} parent=1 // pred_fallthru
      _
    // Predicated region
    $region6: #{tpu_custom_call.1} parent=1 // pred_check
      _
    $region7: #{tpu_custom_call.1} parent=1 // pred_check_branch
      %17 = sbr.rel (0) target = $region9
    $region8: #{tpu_custom_call.1} parent=1 // pred_region
      %18 = dma.done [#allocation3], 16
    $region9: #{tpu_custom_call.1} parent=1 // pred_fallthru
      _
    %19 = sfence
    %s20 = sld [smem:[#allocation2]]
    %s21 = scalar_lea.smem [#allocation5], 0
    %22 = sst [smem:[%s21]] %s20
    %s23 = sld [smem:[#allocation2 + $0x1]]
    %s24 = scalar_lea.smem [#allocation5], 1
    %25 = sst [smem:[%s24]] %s23
    %s26 = scalar_lea.smem [#allocation5], 2
    %27 = sst [smem:[%s26]] 12
    %s28 = scalar_lea.smem [#allocation5], 3
    %29 = sst [smem:[%s28]] 64
    // Predicated region
    $region10: #{tpu_custom_call.1} parent=1 // pred_check
      _
    $region11: #{tpu_custom_call.1} parent=1 // pred_check_branch
      %31 = sbr.rel (0) target = $region13
    $region12: #{tpu_custom_call.1} parent=1 // pred_region
      %s33 = ssub.s32 16, 16
      %34 = vsyncadd [#allocation4], %s33
      %37 = dma.smem_to_hbm [#allocation5], 16, %s1, [#allocation4]
    $region13: #{tpu_custom_call.1} parent=1 // pred_fallthru
      _
    // Predicated region
    $region14: #{tpu_custom_call.1} parent=1 // pred_check
      _
    $region15: #{tpu_custom_call.1} parent=1 // pred_check_branch
      %39 = sbr.rel (0) target = $region17
    $region16: #{tpu_custom_call.1} parent=1 // pred_region
      %40 = dma.done [#allocation4], 16
    $region17: #{tpu_custom_call.1} parent=1 // pred_fallthru
      _
    %41 = sfence
    %42 = vsyncpa [#allocation3], 1
    %43 = vsyncpa [#allocation4], 1

</llo_original>
